<compile_context>
chip_gen: v6e
topology: v6e:2x2x1
jax: 0.10.0
libtpu: 0.0.40
codegen_flags: <defaults>
</compile_context>

<pallas_src>
import jax
import jax.numpy as jnp
from jax.experimental import pallas as pl
from jax.experimental.pallas import tpu as pltpu

HIDDEN = 10
LANES = 128


def affine_kernel(p_ref, x_ref, o_ref):
    # p_ref : SMEM (32,) f32 = [w1[0:10] | b1[10:20] | w2[20:30] | b2[30] | pad]
    # x_ref / o_ref : VMEM (rows, 128) lane-dense batch slab.
    w2_0 = p_ref[20]
    a = p_ref[0] * w2_0                      # a = sum_j w1[j] * w2[j]
    c = p_ref[30] + p_ref[10] * w2_0         # c = b2 + sum_j b1[j] * w2[j]
    for j in range(1, HIDDEN):               # static unroll on the scalar unit
        w2_j = p_ref[20 + j]
        a = a + p_ref[j] * w2_j
        c = c + p_ref[10 + j] * w2_j
    # Collapsed affine == Linear(1,10) -> Linear(10,1) (valid: no nonlinearity).
    o_ref[...] = x_ref[...] * a + c


def model_forward(x, w1, b1, w2, b2):
    """x: (N, 1) f32. w1/b1/w2: (1, 10), b2: (1, 1). Returns (N, 1) f32."""
    n = x.shape[0]
    rows = pl.cdiv(n, LANES)
    n_pad = rows * LANES

    # Lane-dense batch slab; the padded tail is sliced off after the call.
    x_slab = jnp.pad(x.reshape(-1), (0, n_pad - n)).reshape(rows, LANES)

    # Fuse the 31 parameter scalars into a single SMEM vector (padded to 32).
    params = jnp.concatenate(
        [w1.reshape(-1), b1.reshape(-1), w2.reshape(-1), b2.reshape(-1),
         jnp.zeros((1,), jnp.float32)])

    out_slab = pl.pallas_call(
        affine_kernel,
        out_shape=jax.ShapeDtypeStruct((rows, LANES), jnp.float32),
        in_specs=[
            pl.BlockSpec(memory_space=pltpu.MemorySpace.SMEM),   # fused params
            pl.BlockSpec(memory_space=pltpu.MemorySpace.VMEM),   # x slab
        ],
        out_specs=pl.BlockSpec(memory_space=pltpu.MemorySpace.VMEM),
    )(params, x_slab)

    return out_slab.reshape(-1)[:n].reshape(n, 1)


def init_params(key):
    """Deterministic init matching nn.Linear(1,10) then nn.Linear(10,1) shapes."""
    k1, k2, k3, k4 = jax.random.split(key, 4)
    # PyTorch nn.Linear stores weight as (out, in); we keep lane-friendly rows.
    w1 = jax.random.uniform(k1, (1, HIDDEN), jnp.float32, -1.0, 1.0)  # W1^T
    b1 = jax.random.uniform(k2, (1, HIDDEN), jnp.float32, -1.0, 1.0)  # bias1
    w2 = jax.random.uniform(k3, (1, HIDDEN), jnp.float32, -1.0, 1.0)  # W2 row
    b2 = jax.random.uniform(k4, (1, 1), jnp.float32, -1.0, 1.0)       # bias2
    return w1, b1, w2, b2


if __name__ == "__main__":
    key = jax.random.PRNGKey(0)
    kx, kp = jax.random.split(key)

    N = 500  # matches `x = torch.rand([500, 1])`
    x = jax.random.uniform(kx, (N, 1), jnp.float32)
    w1, b1, w2, b2 = init_params(kp)

    out = model_forward(x, w1, b1, w2, b2)
    out = jax.block_until_ready(out)

    # Reference check in plain JAX (same math, layer by layer).
    ref = (x @ w1 + b1) @ w2.T + b2
    assert out.shape == (N, 1)
    assert jnp.allclose(out, ref, atol=1e-5, rtol=1e-5)

    print("KERNEL_OK")
</pallas_src>

<mosaic_0001>
module attributes {stable_mosaic.version = 11 : i64} {
  func.func @affine_kernel(%arg0: memref<32xf32, #tpu.memory_space<smem>>, %arg1: memref<4x128xf32, #tpu.memory_space<vmem>>, %arg2: memref<4x128xf32, #tpu.memory_space<vmem>>) attributes {dimension_semantics = [], scalar_prefetch = 0 : i64, scratch_operands = 0 : i64, tpu.core_type = #tpu.core_type<tc>} {
    %c20 = arith.constant 20 : index
    %0 = memref.load %arg0[%c20] : memref<32xf32, #tpu.memory_space<smem>>
    %c0 = arith.constant 0 : index
    %1 = memref.load %arg0[%c0] : memref<32xf32, #tpu.memory_space<smem>>
    %2 = arith.mulf %1, %0 : f32
    %c30 = arith.constant 30 : index
    %3 = memref.load %arg0[%c30] : memref<32xf32, #tpu.memory_space<smem>>
    %c10 = arith.constant 10 : index
    %4 = memref.load %arg0[%c10] : memref<32xf32, #tpu.memory_space<smem>>
    %5 = arith.mulf %4, %0 : f32
    %6 = arith.addf %3, %5 : f32
    %c21 = arith.constant 21 : index
    %7 = memref.load %arg0[%c21] : memref<32xf32, #tpu.memory_space<smem>>
    %c1 = arith.constant 1 : index
    %8 = memref.load %arg0[%c1] : memref<32xf32, #tpu.memory_space<smem>>
    %9 = arith.mulf %8, %7 : f32
    %10 = arith.addf %2, %9 : f32
    %c11 = arith.constant 11 : index
    %11 = memref.load %arg0[%c11] : memref<32xf32, #tpu.memory_space<smem>>
    %12 = arith.mulf %11, %7 : f32
    %13 = arith.addf %6, %12 : f32
    %c22 = arith.constant 22 : index
    %14 = memref.load %arg0[%c22] : memref<32xf32, #tpu.memory_space<smem>>
    %c2 = arith.constant 2 : index
    %15 = memref.load %arg0[%c2] : memref<32xf32, #tpu.memory_space<smem>>
    %16 = arith.mulf %15, %14 : f32
    %17 = arith.addf %10, %16 : f32
    %c12 = arith.constant 12 : index
    %18 = memref.load %arg0[%c12] : memref<32xf32, #tpu.memory_space<smem>>
    %19 = arith.mulf %18, %14 : f32
    %20 = arith.addf %13, %19 : f32
    %c23 = arith.constant 23 : index
    %21 = memref.load %arg0[%c23] : memref<32xf32, #tpu.memory_space<smem>>
    %c3 = arith.constant 3 : index
    %22 = memref.load %arg0[%c3] : memref<32xf32, #tpu.memory_space<smem>>
    %23 = arith.mulf %22, %21 : f32
    %24 = arith.addf %17, %23 : f32
    %c13 = arith.constant 13 : index
    %25 = memref.load %arg0[%c13] : memref<32xf32, #tpu.memory_space<smem>>
    %26 = arith.mulf %25, %21 : f32
    %27 = arith.addf %20, %26 : f32
    %c24 = arith.constant 24 : index
    %28 = memref.load %arg0[%c24] : memref<32xf32, #tpu.memory_space<smem>>
    %c4 = arith.constant 4 : index
    %29 = memref.load %arg0[%c4] : memref<32xf32, #tpu.memory_space<smem>>
    %30 = arith.mulf %29, %28 : f32
    %31 = arith.addf %24, %30 : f32
    %c14 = arith.constant 14 : index
    %32 = memref.load %arg0[%c14] : memref<32xf32, #tpu.memory_space<smem>>
    %33 = arith.mulf %32, %28 : f32
    %34 = arith.addf %27, %33 : f32
    %c25 = arith.constant 25 : index
    %35 = memref.load %arg0[%c25] : memref<32xf32, #tpu.memory_space<smem>>
    %c5 = arith.constant 5 : index
    %36 = memref.load %arg0[%c5] : memref<32xf32, #tpu.memory_space<smem>>
    %37 = arith.mulf %36, %35 : f32
    %38 = arith.addf %31, %37 : f32
    %c15 = arith.constant 15 : index
    %39 = memref.load %arg0[%c15] : memref<32xf32, #tpu.memory_space<smem>>
    %40 = arith.mulf %39, %35 : f32
    %41 = arith.addf %34, %40 : f32
    %c26 = arith.constant 26 : index
    %42 = memref.load %arg0[%c26] : memref<32xf32, #tpu.memory_space<smem>>
    %c6 = arith.constant 6 : index
    %43 = memref.load %arg0[%c6] : memref<32xf32, #tpu.memory_space<smem>>
    %44 = arith.mulf %43, %42 : f32
    %45 = arith.addf %38, %44 : f32
    %c16 = arith.constant 16 : index
    %46 = memref.load %arg0[%c16] : memref<32xf32, #tpu.memory_space<smem>>
    %47 = arith.mulf %46, %42 : f32
    %48 = arith.addf %41, %47 : f32
    %c27 = arith.constant 27 : index
    %49 = memref.load %arg0[%c27] : memref<32xf32, #tpu.memory_space<smem>>
    %c7 = arith.constant 7 : index
    %50 = memref.load %arg0[%c7] : memref<32xf32, #tpu.memory_space<smem>>
    %51 = arith.mulf %50, %49 : f32
    %52 = arith.addf %45, %51 : f32
    %c17 = arith.constant 17 : index
    %53 = memref.load %arg0[%c17] : memref<32xf32, #tpu.memory_space<smem>>
    %54 = arith.mulf %53, %49 : f32
    %55 = arith.addf %48, %54 : f32
    %c28 = arith.constant 28 : index
    %56 = memref.load %arg0[%c28] : memref<32xf32, #tpu.memory_space<smem>>
    %c8 = arith.constant 8 : index
    %57 = memref.load %arg0[%c8] : memref<32xf32, #tpu.memory_space<smem>>
    %58 = arith.mulf %57, %56 : f32
    %59 = arith.addf %52, %58 : f32
    %c18 = arith.constant 18 : index
    %60 = memref.load %arg0[%c18] : memref<32xf32, #tpu.memory_space<smem>>
    %61 = arith.mulf %60, %56 : f32
    %62 = arith.addf %55, %61 : f32
    %c29 = arith.constant 29 : index
    %63 = memref.load %arg0[%c29] : memref<32xf32, #tpu.memory_space<smem>>
    %c9 = arith.constant 9 : index
    %64 = memref.load %arg0[%c9] : memref<32xf32, #tpu.memory_space<smem>>
    %65 = arith.mulf %64, %63 : f32
    %66 = arith.addf %59, %65 : f32
    %c19 = arith.constant 19 : index
    %67 = memref.load %arg0[%c19] : memref<32xf32, #tpu.memory_space<smem>>
    %68 = arith.mulf %67, %63 : f32
    %69 = arith.addf %62, %68 : f32
    %c0_0 = arith.constant 0 : index
    %c0_1 = arith.constant 0 : index
    %70 = vector.load %arg1[%c0_0, %c0_1] : memref<4x128xf32, #tpu.memory_space<vmem>>, vector<4x128xf32>
    %71 = vector.broadcast %66 : f32 to vector<4x128xf32>
    %72 = arith.mulf %70, %71 : vector<4x128xf32>
    %73 = vector.broadcast %69 : f32 to vector<4x128xf32>
    %74 = arith.addf %72, %73 : vector<4x128xf32>
    %c0_2 = arith.constant 0 : index
    %c0_3 = arith.constant 0 : index
    %75 = vector.load %arg2[%c0_2, %c0_3] : memref<4x128xf32, #tpu.memory_space<vmem>>, vector<4x128xf32>
    tpu.vector_store %arg2[%c0_2, %c0_3], %74 {strides = array<i32>} : memref<4x128xf32, #tpu.memory_space<vmem>>, vector<4x128xf32>,
    return
  }
}

</mosaic_0001>

<llo_original>
// kernel: tpu_custom_call.1
$region0: #{tpu_custom_call.1}
  #allocation0 [shape = 'u32[]', space=smem, size = 0x4, offset = 0x4, fixed_abs, tag = 'smem constant byte address 0x4 - core index']
  #allocation1 [shape = 'u32[144,128]{1,0:T(1,128)}', space=vmem, size = 0x12000, scoped, tag = 'internal scratch']
  %s0 = inlined_call_operand.hbm [shape: f32[32], index: 0, kind: input, shape index: {}]
  %s1 = inlined_call_operand.hbm [shape: f32[4,128], index: 1, kind: input, shape index: {}]
  %s2 = inlined_call_operand.hbm [shape: f32[4,128], index: 2, kind: output, shape index: {}]
  %s3 = sld [smem:[#allocation0]]
  $region26: #{tpu_custom_call.1} parent=0
    _
  %s5 = ssub.s32 1, %s3
  %s6 = scalar_select 0, %s5, %s3
  $region1: #{tpu_custom_call.1} parent=0
    #allocation2 [shape = 'u8[512]{0}', space=smem, size = 0x200, scoped, tag = 'input window, operand 0, single buffered']
    #allocation3 [shape = 's32[1]{0}', space=sflag, size = 0x4, scoped, tag = 'scoped memory for tpu_custom_call.1']
    #allocation4 [shape = 's32[1]{0}', space=sflag, size = 0x4, scoped, tag = 'scoped memory for tpu_custom_call.1']
    #allocation5 [shape = 's32[1]{0}', space=sflag, size = 0x4, scoped, tag = 'scoped memory for tpu_custom_call.1']
    #allocation6 [shape = 'u8[2048]{0}', space=vmem, size = 0x800, scoped, tag = 'input window, operand 1, single buffered']
    #allocation7 [shape = 'u8[2048]{0}', space=vmem, size = 0x800, scoped, tag = 'output window, operand 0, single buffered']
    %7 = vsyncpa [#allocation5], 0
    %8 = vsyncpa [#allocation3], 0
    %9 = vsyncpa [#allocation4], 0
    // Predicated region
    $region2: #{tpu_custom_call.1} parent=1 // pred_check
      _
    $region3: #{tpu_custom_call.1} parent=1 // pred_check_branch
      %11 = sbr.rel (0) target = $region5
    $region4: #{tpu_custom_call.1} parent=1 // pred_region
      %s13 = ssub.s32 16, 16
      %14 = vsyncadd [#allocation5], %s13
      %17 = dma.hbm_to_smem %s0, 16, [#allocation2], [#allocation5]
    $region5: #{tpu_custom_call.1} parent=1 // pred_fallthru
      _
    // Predicated region
    $region6: #{tpu_custom_call.1} parent=1 // pred_check
      _
    $region7: #{tpu_custom_call.1} parent=1 // pred_check_branch
      %19 = sbr.rel (0) target = $region9
    $region8: #{tpu_custom_call.1} parent=1 // pred_region
      %s21 = ssub.s32 64, 64
      %22 = vsyncadd [#allocation3], %s21
      %s24 = sshll.u32 [#allocation6], 4
      %s25 = int_to_ptr.vmem [resolvable:$true] %s24
      %27 = dma.hbm_to_vmem [thread:$0]  %s1, 64, %s25, [#allocation3]
    $region9: #{tpu_custom_call.1} parent=1 // pred_fallthru
      _
    // Predicated region
    $region10: #{tpu_custom_call.1} parent=1 // pred_check
      _
    $region11: #{tpu_custom_call.1} parent=1 // pred_check_branch
      %29 = sbr.rel (0) target = $region13
    $region12: #{tpu_custom_call.1} parent=1 // pred_region
      %30 = dma.done [#allocation5], 16
    $region13: #{tpu_custom_call.1} parent=1 // pred_fallthru
      _
    // Predicated region
    $region14: #{tpu_custom_call.1} parent=1 // pred_check
      _
    $region15: #{tpu_custom_call.1} parent=1 // pred_check_branch
      %32 = sbr.rel (0) target = $region17
    $region16: #{tpu_custom_call.1} parent=1 // pred_region
      %33 = dma.done [#allocation3], 64
    $region17: #{tpu_custom_call.1} parent=1 // pred_fallthru
      _
    %34 = sfence
    %s35 = sld [smem:[#allocation2 + $0x14]]
    %s36 = sld [smem:[#allocation2]]
    %s37 = smul.f32 %s36, %s35
    %s38 = sld [smem:[#allocation2 + $0x1e]]
    %s39 = sld [smem:[#allocation2 + $0xa]]
    %s40 = smul.f32 %s39, %s35
    %s41 = sadd.f32 %s38, %s40
    %s42 = sld [smem:[#allocation2 + $0x15]]
    %s43 = sld [smem:[#allocation2 + $0x1]]
    %s44 = smul.f32 %s43, %s42
    %s45 = sadd.f32 %s37, %s44
    %s46 = sld [smem:[#allocation2 + $0xb]]
    %s47 = smul.f32 %s46, %s42
    %s48 = sadd.f32 %s41, %s47
    %s49 = sld [smem:[#allocation2 + $0x16]]
    %s50 = sld [smem:[#allocation2 + $0x2]]
    %s51 = smul.f32 %s50, %s49
    %s52 = sadd.f32 %s45, %s51
    %s53 = sld [smem:[#allocation2 + $0xc]]
    %s54 = smul.f32 %s53, %s49
    %s55 = sadd.f32 %s48, %s54
    %s56 = sld [smem:[#allocation2 + $0x17]]
    %s57 = sld [smem:[#allocation2 + $0x3]]
    %s58 = smul.f32 %s57, %s56
    %s59 = sadd.f32 %s52, %s58
    %s60 = sld [smem:[#allocation2 + $0xd]]
    %s61 = smul.f32 %s60, %s56
    %s62 = sadd.f32 %s55, %s61
    %s63 = sld [smem:[#allocation2 + $0x18]]
    %s64 = sld [smem:[#allocation2 + $0x4]]
    %s65 = smul.f32 %s64, %s63
    %s66 = sadd.f32 %s59, %s65
    %s67 = sld [smem:[#allocation2 + $0xe]]
    %s68 = smul.f32 %s67, %s63
    %s69 = sadd.f32 %s62, %s68
    %s70 = sld [smem:[#allocation2 + $0x19]]
    %s71 = sld [smem:[#allocation2 + $0x5]]
    %s72 = smul.f32 %s71, %s70
    %s73 = sadd.f32 %s66, %s72
    %s74 = sld [smem:[#allocation2 + $0xf]]
    %s75 = smul.f32 %s74, %s70
    %s76 = sadd.f32 %s69, %s75
    %s77 = sld [smem:[#allocation2 + $0x1a]]
    %s78 = sld [smem:[#allocation2 + $0x6]]
    %s79 = smul.f32 %s78, %s77
    %s80 = sadd.f32 %s73, %s79
    %s81 = sld [smem:[#allocation2 + $0x10]]
    %s82 = smul.f32 %s81, %s77
    %s83 = sadd.f32 %s76, %s82
    %s84 = sld [smem:[#allocation2 + $0x1b]]
    %s85 = sld [smem:[#allocation2 + $0x7]]
    %s86 = smul.f32 %s85, %s84
    %s87 = sadd.f32 %s80, %s86
    %s88 = sld [smem:[#allocation2 + $0x11]]
    %s89 = smul.f32 %s88, %s84
    %s90 = sadd.f32 %s83, %s89
    %s91 = sld [smem:[#allocation2 + $0x1c]]
    %s92 = sld [smem:[#allocation2 + $0x8]]
    %s93 = smul.f32 %s92, %s91
    %s94 = sadd.f32 %s87, %s93
    %s95 = sld [smem:[#allocation2 + $0x12]]
    %s96 = smul.f32 %s95, %s91
    %s97 = sadd.f32 %s90, %s96
    %s98 = sld [smem:[#allocation2 + $0x1d]]
    %s99 = sld [smem:[#allocation2 + $0x9]]
    %s100 = smul.f32 %s99, %s98
    %s101 = sadd.f32 %s94, %s100
    %s102 = sld [smem:[#allocation2 + $0x13]]
    %s103 = smul.f32 %s102, %s98
    %s104 = sadd.f32 %s97, %s103
    %v105 = vld [vmem:[#allocation6] sm:$0xf]
    %v106 = vstv %s101
    %v107 = vmul.f32 %v105, %v106
    %v108 = vstv %s104
    %v109 = vadd.f32 %v107, %v108
    %110 = vst [vmem:[#allocation7] sm:$0xf] %v109
    // Predicated region
    $region18: #{tpu_custom_call.1} parent=1 // pred_check
      _
    $region19: #{tpu_custom_call.1} parent=1 // pred_check_branch
      %112 = sbr.rel (0) target = $region21
    $region20: #{tpu_custom_call.1} parent=1 // pred_region
      %s114 = ssub.s32 64, 64
      %115 = vsyncadd [#allocation4], %s114
      %s117 = sshll.u32 [#allocation7], 4
      %s118 = int_to_ptr.vmem [resolvable:$true] %s117
      %120 = dma.vmem_to_hbm [thread:$0]  %s118, 64, %s2, [#allocation4]
    $region21: #{tpu_custom_call.1} parent=1 // pred_fallthru
      _
    // Predicated region
    $region22: #{tpu_custom_call.1} parent=1 // pred_check
      _
    $region23: #{tpu_custom_call.1} parent=1 // pred_check_branch
      %122 = sbr.rel (0) target = $region25
    $region24: #{tpu_custom_call.1} parent=1 // pred_region
      %123 = dma.done [#allocation4], 64
    $region25: #{tpu_custom_call.1} parent=1 // pred_fallthru
      _
    %124 = vsyncpa [#allocation3], 1
    %125 = vsyncpa [#allocation4], 1
    %126 = vsyncpa [#allocation5], 1

</llo_original>
